<compile_context>
chip_gen: v5e
topology: v5e:2x2
jax: 0.10.0
libtpu: 0.0.40
codegen_flags: <defaults>
</compile_context>

<pallas_src>
import math
import jax
import jax.numpy as jnp
from jax.experimental import pallas as pl
from jax.experimental.pallas import tpu as pltpu


# ----------------------------- small helpers --------------------------------

def _round_up(x, m):
    return ((x + m - 1) // m) * m


def _cdiv(a, b):
    return (a + b - 1) // b


def _device_kind():
    try:
        return jax.devices()[0].device_kind.lower()
    except Exception:
        return ""


def _num_tensorcores():
    # v7x has 2 TensorCores per chip; v5e/v6e have 1. Unknown -> assume 2 so we
    # never strand a core (an extra grid step costs ~0.35 us, negligible).
    kind = _device_kind()
    if "v5" in kind or "v6" in kind:
        return 1
    return 2


def _default_compute_dtype():
    # bf16-native MXU (and bf16 VPU) on v6e/v7x -> halve weight DMA/VMEM and
    # 2x MXU throughput; keep f32 on v5e / unknown (cast work not worth it for
    # tiny CTR hidden dims there).
    kind = _device_kind()
    if "v6" in kind or "v7" in kind:
        return jnp.bfloat16
    return jnp.float32


def _vmem_capacity_bytes():
    try:
        return int(pltpu.get_tpu_info().vmem_capacity_bytes)
    except Exception:
        kind = _device_kind()
        return (64 << 20) if "v7" in kind else (128 << 20)


def _vmem_ceiling_bytes():
    cap = _vmem_capacity_bytes()
    # leave headroom for Mosaic internal scratch: ~54 MiB on v7x, ~108 MiB on
    # v5e/v6e instead of a hard 64 MiB clamp.
    return min(int(cap * 0.85), cap - (8 << 20))


def _choose_tm(B, cap):
    """Balanced batch tile: avoid padding B=257 up to 512-style waste."""
    if B <= cap:
        return _round_up(max(B, 1), 8)
    n_tiles = _cdiv(B, cap)
    return _round_up(_cdiv(B, n_tiles), 8)


def _pick_feature_tile(d_pad, cap):
    """Largest multiple of 128 that divides d_pad and is <= cap."""
    q = d_pad // 128
    best = 128
    for t in range(1, q + 1):
        if q % t == 0 and 128 * t <= cap:
            best = 128 * t
    return best


def _const_block_spec(shape, single_buffer):
    """Full-block resident operand (constant index_map). When requested, ask for
    a single buffer — the operand is never re-fetched, so double-buffering it
    only wastes VMEM."""
    if single_buffer and hasattr(pl, "Buffered"):
        try:
            return pl.BlockSpec(shape, lambda i: (0, 0),
                                pipeline_mode=pl.Buffered(1))
        except TypeError:
            pass
    return pl.BlockSpec(shape, lambda i: (0, 0))


def _fused_vmem_need(tm, prepped, x_itemsize, out_itemsize, weight_buf_factor):
    weight_bytes = sum(int(wt.size) * wt.dtype.itemsize
                       + int(sh.size) * sh.dtype.itemsize
                       for wt, sh, _, _ in prepped)
    d_in0_pad = prepped[0][0].shape[0]
    d_out_last_pad = prepped[-1][0].shape[1]
    act_bytes = (2 * tm * d_in0_pad * x_itemsize
                 + 2 * tm * d_out_last_pad * out_itemsize)
    inter_bytes = sum(tm * wt.shape[1] * 4 for wt, _, _, _ in prepped)
    return weight_buf_factor * weight_bytes + act_bytes + inter_bytes


# ------------------------------ kernels --------------------------------------

def _make_fused_mlp_kernel(num_layers):
    """One batch tile: chained (matmul -> +shift -> ReLU) for every layer.

    Ref order: (x_ref, wt_0, shift_0, wt_1, shift_1, ..., o_ref)
      x_ref:    (tm, d_in0_pad)          activation tile
      wt_l:     (d_inl_pad, d_outl_pad)  BN-scale-folded transposed weight
      shift_l:  (1, d_outl_pad)          folded bias/BN shift (f32)
      o_ref:    (tm, d_outL_pad)
    """

    def kernel(x_ref, *refs):
        o_ref = refs[-1]
        h = x_ref[...]
        for l in range(num_layers):
            wt_ref = refs[2 * l]
            sh_ref = refs[2 * l + 1]
            acc = jnp.dot(h.astype(wt_ref.dtype), wt_ref[...],
                          preferred_element_type=jnp.float32)
            # f32 epilogue (add + ReLU); next layer re-casts to the MXU dtype.
            h = jnp.maximum(acc + sh_ref[...], 0.0)
        o_ref[...] = h.astype(o_ref.dtype)

    return kernel


def _layerwise_linear_relu_kernel(x_ref, wt_ref, sh_ref, o_ref, acc_ref):
    """Tiled (M, N, K) matmul with f32 accumulator and fused +shift / ReLU.
    Used only when the whole weight stack does not fit resident in VMEM."""
    k = pl.program_id(2)

    @pl.when(k == 0)
    def _():
        acc_ref[...] = jnp.zeros_like(acc_ref)

    acc_ref[...] += jnp.dot(x_ref[...].astype(wt_ref.dtype), wt_ref[...],
                            preferred_element_type=jnp.float32)

    @pl.when(k == pl.num_programs(2) - 1)
    def _():
        o_ref[...] = jnp.maximum(acc_ref[...] + sh_ref[...], 0.0
                                 ).astype(o_ref.dtype)


# --------------------------- parameter preparation ---------------------------

def prepare_mlp_params(params, *, batch_norm, eps=1e-5, compute_dtype=None):
    """One-time prep: fold eval-mode BN + bias into (transposed, padded) weights.

    Returns a list of (wt_padded, shift_padded, d_in, d_out) per layer.
    Done outside the per-forward call path (no per-call transpose / pad / cast).
    """
    if compute_dtype is None:
        compute_dtype = _default_compute_dtype()

    prepped = []
    for p in params:
        w, b = p["w"], p["b"]                  # w: (d_out, d_in)
        d_out, d_in = w.shape
        if batch_norm:
            inv_std = 1.0 / jnp.sqrt(p["running_var"].astype(jnp.float32) + eps)
            scale = p["gamma"].astype(jnp.float32) * inv_std          # (d_out,)
            shift = (p["beta"].astype(jnp.float32)
                     + (b.astype(jnp.float32)
                        - p["running_mean"].astype(jnp.float32)) * scale)
        else:
            scale = jnp.ones((d_out,), jnp.float32)
            shift = b.astype(jnp.float32)

        # Fold the per-output-column scale into the transposed weight.
        wt = w.astype(jnp.float32).T * scale[None, :]                 # (d_in, d_out)

        d_in_pad = _round_up(d_in, 128)
        d_out_pad = _round_up(d_out, 128)
        wt_p = jnp.zeros((d_in_pad, d_out_pad), compute_dtype)
        wt_p = wt_p.at[:d_in, :d_out].set(wt.astype(compute_dtype))
        sh_p = jnp.zeros((1, d_out_pad), jnp.float32)
        sh_p = sh_p.at[:, :d_out].set(shift)
        prepped.append((wt_p, sh_p, d_in, d_out))
    return prepped


# ------------------------------ pallas_call paths ----------------------------

def _run_fused(x_p, prepped, *, tm, B_pad, d_out_last_pad, vmem_ceiling,
               single_buffer):
    num_layers = len(prepped)
    d_in0_pad = prepped[0][0].shape[0]
    out_dtype = x_p.dtype

    flat_inputs = [x_p]
    in_specs = [pl.BlockSpec((tm, d_in0_pad), lambda i: (i, 0))]
    for wt_p, sh_p, _, _ in prepped:
        flat_inputs.append(wt_p)
        flat_inputs.append(sh_p)
        in_specs.append(_const_block_spec(wt_p.shape, single_buffer))
        in_specs.append(_const_block_spec(sh_p.shape, single_buffer))
    out_spec = pl.BlockSpec((tm, d_out_last_pad), lambda i: (i, 0))

    wfac = 1 if single_buffer else 2
    need = _fused_vmem_need(tm, prepped, x_p.dtype.itemsize,
                            out_dtype.itemsize, wfac)
    vmem_limit = int(min(max(need + (2 << 20), 16 << 20), vmem_ceiling))

    flops = 2 * B_pad * sum(int(wt.shape[0]) * int(wt.shape[1])
                            for wt, _, _, _ in prepped)
    bytes_accessed = (int(x_p.size) * x_p.dtype.itemsize
                      + sum(int(wt.size) * wt.dtype.itemsize
                            + int(sh.size) * sh.dtype.itemsize
                            for wt, sh, _, _ in prepped)
                      + B_pad * d_out_last_pad * out_dtype.itemsize)

    return pl.pallas_call(
        _make_fused_mlp_kernel(num_layers),
        out_shape=jax.ShapeDtypeStruct((B_pad, d_out_last_pad), out_dtype),
        grid=(B_pad // tm,),
        in_specs=in_specs,
        out_specs=out_spec,
        compiler_params=pltpu.CompilerParams(
            dimension_semantics=("parallel",),
            vmem_limit_bytes=vmem_limit),
        cost_estimate=pl.CostEstimate(flops=flops, transcendentals=0,
                                      bytes_accessed=bytes_accessed),
    )(*flat_inputs)


def _run_layerwise(x_p, prepped, *, tm, B_pad, vmem_ceiling):
    """Fallback when the resident weight stack exceeds the VMEM budget (e.g.
    ~4096x4096 f32 layers on v7x's 64 MiB): per-layer tiled matmul with an f32
    accumulator; intermediate activations round-trip HBM."""
    h = x_p
    act_dtype = x_p.dtype
    for wt_p, sh_p, _, _ in prepped:
        d_in_pad, d_out_pad = wt_p.shape
        tk = _pick_feature_tile(d_in_pad, 512)
        tn = _pick_feature_tile(d_out_pad, 512)

        need = (2 * tm * tk * act_dtype.itemsize
                + 2 * tk * tn * wt_p.dtype.itemsize
                + 2 * tn * sh_p.dtype.itemsize
                + 2 * tm * tn * act_dtype.itemsize
                + tm * tn * 4)
        vmem_limit = int(min(max(need + (2 << 20), 16 << 20), vmem_ceiling))
        flops = 2 * B_pad * d_in_pad * d_out_pad
        bytes_accessed = (B_pad * d_in_pad * act_dtype.itemsize
                          + int(wt_p.size) * wt_p.dtype.itemsize
                          + int(sh_p.size) * sh_p.dtype.itemsize
                          + B_pad * d_out_pad * act_dtype.itemsize)

        h = pl.pallas_call(
            _layerwise_linear_relu_kernel,
            out_shape=jax.ShapeDtypeStruct((B_pad, d_out_pad), act_dtype),
            grid=(B_pad // tm, d_out_pad // tn, d_in_pad // tk),
            in_specs=[
                pl.BlockSpec((tm, tk), lambda i, j, k: (i, k)),
                pl.BlockSpec((tk, tn), lambda i, j, k: (k, j)),
                pl.BlockSpec((1, tn), lambda i, j, k: (0, j)),
            ],
            out_specs=pl.BlockSpec((tm, tn), lambda i, j, k: (i, j)),
            scratch_shapes=[pltpu.VMEM((tm, tn), jnp.float32)],
            compiler_params=pltpu.CompilerParams(
                dimension_semantics=("parallel", "parallel", "arbitrary"),
                vmem_limit_bytes=vmem_limit),
            cost_estimate=pl.CostEstimate(flops=flops, transcendentals=0,
                                          bytes_accessed=bytes_accessed),
        )(h, wt_p, sh_p)
    return h


def mlp_layer_fused(x, prepped, *, tm=None, tm_cap=1024, force_layerwise=False):
    """Run the whole MLP stack (eval mode) with Pallas kernels."""
    B, d_in = x.shape
    d_in0_pad = prepped[0][0].shape[0]
    d_out_last = prepped[-1][3]
    d_out_last_pad = prepped[-1][0].shape[1]
    assert prepped[0][2] == d_in, "input feature dim mismatch"

    vmem_ceiling = _vmem_ceiling_bytes()

    # --- batch tile selection -------------------------------------------------
    user_tm = tm is not None
    if not user_tm:
        tm = _choose_tm(B, tm_cap)
        # Multi-TensorCore chips (v7x): make sure the "parallel" grid axis has
        # at least 2 steps so both cores get work.
        if (_num_tensorcores() >= 2 and B >= 16
                and _round_up(B, tm) // tm == 1):
            tm = _round_up(_cdiv(B, 2), 8)

    def _need(t, wfac=1):
        return _fused_vmem_need(t, prepped, x.dtype.itemsize,
                                x.dtype.itemsize, wfac)

    tm_fused = tm
    if not user_tm:
        while tm_fused > 8 and _need(tm_fused) > vmem_ceiling:
            tm_fused = max(8, _round_up(tm_fused // 2, 8))

    use_layerwise = force_layerwise or _need(tm_fused) > vmem_ceiling
    if not use_layerwise:
        tm = tm_fused
    B_pad = _round_up(B, tm)

    # --- input pad (skip when already aligned) ---------------------------------
    if B_pad == B and d_in0_pad == d_in:
        x_p = x
    else:
        x_p = jnp.zeros((B_pad, d_in0_pad), x.dtype).at[:B, :d_in].set(x)

    # --- run --------------------------------------------------------------------
    if use_layerwise:
        out = _run_layerwise(x_p, prepped, tm=tm, B_pad=B_pad,
                             vmem_ceiling=vmem_ceiling)
    else:
        try:
            out = _run_fused(x_p, prepped, tm=tm, B_pad=B_pad,
                             d_out_last_pad=d_out_last_pad,
                             vmem_ceiling=vmem_ceiling, single_buffer=True)
        except Exception:
            # Older Pallas builds may reject pl.Buffered(1) on constant
            # operands — fall back to default (double-buffered) specs.
            out = _run_fused(x_p, prepped, tm=tm, B_pad=B_pad,
                             d_out_last_pad=d_out_last_pad,
                             vmem_ceiling=vmem_ceiling, single_buffer=False)

    if B_pad == B and d_out_last_pad == d_out_last:
        return out
    return out[:B, :d_out_last]


# ------------------------------ module wrapper --------------------------------

def init_mlp_params(key, input_dim, hidden_units, batch_norm):
    """Deterministic init mirroring MlpUnitLayer._init_weight_:
    xavier_normal_ on Linear weight, zeros on bias; BN gamma=1, beta=0,
    running_mean=0, running_var=1 (fresh module)."""
    params = []
    dims = [input_dim] + list(hidden_units)
    for i in range(len(hidden_units)):
        d_in, d_out = dims[i], dims[i + 1]
        key, wkey = jax.random.split(key)
        std = math.sqrt(2.0 / (d_in + d_out))  # xavier normal (gain=1)
        w = std * jax.random.normal(wkey, (d_out, d_in), dtype=jnp.float32)
        params.append(dict(
            w=w,
            b=jnp.zeros((d_out,), jnp.float32),
            gamma=jnp.ones((d_out,), jnp.float32),
            beta=jnp.zeros((d_out,), jnp.float32),
            running_mean=jnp.zeros((d_out,), jnp.float32),
            running_var=jnp.ones((d_out,), jnp.float32),
        ))
    return params


def mlp_layer(x, params, *, batch_norm, dropout_rates, eps=1e-5,
              compute_dtype=None):
    """MlpLayer.forward (eval mode). Dropout is identity in eval."""
    del dropout_rates  # eval-mode dropout is identity
    prepped = prepare_mlp_params(params, batch_norm=batch_norm, eps=eps,
                                 compute_dtype=compute_dtype)
    return mlp_layer_fused(x, prepped)


# ------------------------------------ main -------------------------------------

if __name__ == "__main__":
    key = jax.random.PRNGKey(0)
    batch = 8
    input_dim = 32
    hidden_units = [64, 32, 16]
    batch_norm = True
    dropout_rates = 0.1  # identity in eval mode

    key, xkey, pkey = jax.random.split(key, 3)
    x = jax.random.normal(xkey, (batch, input_dim), dtype=jnp.float32)
    params = init_mlp_params(pkey, input_dim, hidden_units, batch_norm)

    # plain-JAX eval-mode reference
    ref = x
    for p in params:
        y = ref @ p["w"].T + p["b"]
        if batch_norm:
            y = (y - p["running_mean"]) / jnp.sqrt(p["running_var"] + 1e-5)
            y = y * p["gamma"] + p["beta"]
        ref = jnp.maximum(y, 0.0)

    # 1) fused whole-stack kernel, f32 MXU inputs (exact-precision path)
    prepped_f32 = prepare_mlp_params(params, batch_norm=batch_norm,
                                     compute_dtype=jnp.float32)
    out = mlp_layer_fused(x, prepped_f32)
    jax.block_until_ready(out)
    assert out.shape == (batch, hidden_units[-1])
    assert jnp.allclose(out, ref, atol=1e-4, rtol=1e-4), \
        float(jnp.max(jnp.abs(out - ref)))

    # 2) generation-default dtype (bf16 MXU inputs on v6e/v7x) — looser tol
    prepped_auto = prepare_mlp_params(params, batch_norm=batch_norm)
    out_auto = mlp_layer_fused(x, prepped_auto)
    jax.block_until_ready(out_auto)
    tol = 1e-4 if prepped_auto[0][0].dtype == jnp.float32 else 1e-1
    assert jnp.allclose(out_auto, ref, atol=tol, rtol=tol), \
        float(jnp.max(jnp.abs(out_auto - ref)))

    # 3) VMEM-overflow fallback path (layerwise tiled matmul), forced
    out_lw = mlp_layer_fused(x, prepped_f32, force_layerwise=True)
    jax.block_until_ready(out_lw)
    assert jnp.allclose(out_lw, ref, atol=1e-4, rtol=1e-4), \
        float(jnp.max(jnp.abs(out_lw - ref)))

    print("KERNEL_OK")
</pallas_src>

<mosaic_0001>
module attributes {stable_mosaic.version = 11 : i64} {
  func.func @kernel(%arg0: i32, %arg1: memref<8x128xf32, #tpu.memory_space<vmem>>, %arg2: memref<128x128xf32, #tpu.memory_space<vmem>>, %arg3: memref<1x128xf32, #tpu.memory_space<vmem>>, %arg4: memref<128x128xf32, #tpu.memory_space<vmem>>, %arg5: memref<1x128xf32, #tpu.memory_space<vmem>>, %arg6: memref<128x128xf32, #tpu.memory_space<vmem>>, %arg7: memref<1x128xf32, #tpu.memory_space<vmem>>, %arg8: memref<8x128xf32, #tpu.memory_space<vmem>>) attributes {dimension_semantics = [#tpu.dimension_semantics<parallel>], iteration_bounds = array<i64: 1>, scalar_prefetch = 0 : i64, scratch_operands = 0 : i64, tpu.core_type = #tpu.core_type<tc>, window_params = [{transform_indices = @transform_0, window_bounds = array<i64: 8, 128>}, {pipeline_mode = #tpu.pipeline_mode<synchronous>, transform_indices = @transform_1, window_bounds = array<i64: 128, 128>}, {pipeline_mode = #tpu.pipeline_mode<synchronous>, transform_indices = @transform_2, window_bounds = array<i64: 1, 128>}, {pipeline_mode = #tpu.pipeline_mode<synchronous>, transform_indices = @transform_3, window_bounds = array<i64: 128, 128>}, {pipeline_mode = #tpu.pipeline_mode<synchronous>, transform_indices = @transform_4, window_bounds = array<i64: 1, 128>}, {pipeline_mode = #tpu.pipeline_mode<synchronous>, transform_indices = @transform_5, window_bounds = array<i64: 128, 128>}, {pipeline_mode = #tpu.pipeline_mode<synchronous>, transform_indices = @transform_6, window_bounds = array<i64: 1, 128>}, {transform_indices = @transform_7, window_bounds = array<i64: 8, 128>}]} {
    %c0 = arith.constant 0 : index
    %c0_0 = arith.constant 0 : index
    %0 = vector.load %arg1[%c0, %c0_0] : memref<8x128xf32, #tpu.memory_space<vmem>>, vector<8x128xf32>
    %c0_1 = arith.constant 0 : index
    %c0_2 = arith.constant 0 : index
    %1 = vector.load %arg2[%c0_1, %c0_2] : memref<128x128xf32, #tpu.memory_space<vmem>>, vector<128x128xf32>
    %cst = arith.constant dense<0.000000e+00> : vector<8x128xf32>
    %2 = tpu.matmul %0, %1, %cst {dimension_numbers = #tpu.dot_dimension_numbers<[1], [0], [0], [1], [0, 0, 1, 1], [], []>} : vector<8x128xf32>, vector<128x128xf32>, vector<8x128xf32> -> vector<8x128xf32>
    %c0_3 = arith.constant 0 : index
    %c0_4 = arith.constant 0 : index
    %3 = vector.load %arg3[%c0_3, %c0_4] : memref<1x128xf32, #tpu.memory_space<vmem>>, vector<1x128xf32>
    %4 = vector.broadcast %3 : vector<1x128xf32> to vector<8x128xf32>
    %5 = arith.addf %2, %4 : vector<8x128xf32>
    %cst_5 = arith.constant 0.000000e+00 : f32
    %6 = vector.broadcast %cst_5 : f32 to vector<8x128xf32>
    %7 = arith.maximumf %5, %6 : vector<8x128xf32>
    %c0_6 = arith.constant 0 : index
    %c0_7 = arith.constant 0 : index
    %8 = vector.load %arg4[%c0_6, %c0_7] : memref<128x128xf32, #tpu.memory_space<vmem>>, vector<128x128xf32>
    %cst_8 = arith.constant dense<0.000000e+00> : vector<8x128xf32>
    %9 = tpu.matmul %7, %8, %cst_8 {dimension_numbers = #tpu.dot_dimension_numbers<[1], [0], [0], [1], [0, 0, 1, 1], [], []>} : vector<8x128xf32>, vector<128x128xf32>, vector<8x128xf32> -> vector<8x128xf32>
    %c0_9 = arith.constant 0 : index
    %c0_10 = arith.constant 0 : index
    %10 = vector.load %arg5[%c0_9, %c0_10] : memref<1x128xf32, #tpu.memory_space<vmem>>, vector<1x128xf32>
    %11 = vector.broadcast %10 : vector<1x128xf32> to vector<8x128xf32>
    %12 = arith.addf %9, %11 : vector<8x128xf32>
    %cst_11 = arith.constant 0.000000e+00 : f32
    %13 = vector.broadcast %cst_11 : f32 to vector<8x128xf32>
    %14 = arith.maximumf %12, %13 : vector<8x128xf32>
    %c0_12 = arith.constant 0 : index
    %c0_13 = arith.constant 0 : index
    %15 = vector.load %arg6[%c0_12, %c0_13] : memref<128x128xf32, #tpu.memory_space<vmem>>, vector<128x128xf32>
    %cst_14 = arith.constant dense<0.000000e+00> : vector<8x128xf32>
    %16 = tpu.matmul %14, %15, %cst_14 {dimension_numbers = #tpu.dot_dimension_numbers<[1], [0], [0], [1], [0, 0, 1, 1], [], []>} : vector<8x128xf32>, vector<128x128xf32>, vector<8x128xf32> -> vector<8x128xf32>
    %c0_15 = arith.constant 0 : index
    %c0_16 = arith.constant 0 : index
    %17 = vector.load %arg7[%c0_15, %c0_16] : memref<1x128xf32, #tpu.memory_space<vmem>>, vector<1x128xf32>
    %18 = vector.broadcast %17 : vector<1x128xf32> to vector<8x128xf32>
    %19 = arith.addf %16, %18 : vector<8x128xf32>
    %cst_17 = arith.constant 0.000000e+00 : f32
    %20 = vector.broadcast %cst_17 : f32 to vector<8x128xf32>
    %21 = arith.maximumf %19, %20 : vector<8x128xf32>
    %c0_18 = arith.constant 0 : index
    %c0_19 = arith.constant 0 : index
    %22 = vector.load %arg8[%c0_18, %c0_19] : memref<8x128xf32, #tpu.memory_space<vmem>>, vector<8x128xf32>
    tpu.vector_store %arg8[%c0_18, %c0_19], %21 {strides = array<i32>} : memref<8x128xf32, #tpu.memory_space<vmem>>, vector<8x128xf32>,
    return
  }
  func.func @transform_0(%arg0: i32) -> (i32, i32) {
    %c0_i32 = arith.constant 0 : i32
    %c0_i32_0 = arith.constant 0 : i32
    return %arg0, %c0_i32 : i32, i32
  }
  func.func @transform_1(%arg0: i32) -> (i32, i32) {
    %c0_i32 = arith.constant 0 : i32
    %c0_i32_0 = arith.constant 0 : i32
    %c0_i32_1 = arith.constant 0 : i32
    return %c0_i32, %c0_i32_0 : i32, i32
  }
  func.func @transform_2(%arg0: i32) -> (i32, i32) {
    %c0_i32 = arith.constant 0 : i32
    %c0_i32_0 = arith.constant 0 : i32
    %c0_i32_1 = arith.constant 0 : i32
    return %c0_i32, %c0_i32_0 : i32, i32
  }
  func.func @transform_3(%arg0: i32) -> (i32, i32) {
    %c0_i32 = arith.constant 0 : i32
    %c0_i32_0 = arith.constant 0 : i32
    %c0_i32_1 = arith.constant 0 : i32
    return %c0_i32, %c0_i32_0 : i32, i32
  }
  func.func @transform_4(%arg0: i32) -> (i32, i32) {
    %c0_i32 = arith.constant 0 : i32
    %c0_i32_0 = arith.constant 0 : i32
    %c0_i32_1 = arith.constant 0 : i32
    return %c0_i32, %c0_i32_0 : i32, i32
  }
  func.func @transform_5(%arg0: i32) -> (i32, i32) {
    %c0_i32 = arith.constant 0 : i32
    %c0_i32_0 = arith.constant 0 : i32
    %c0_i32_1 = arith.constant 0 : i32
    return %c0_i32, %c0_i32_0 : i32, i32
  }
  func.func @transform_6(%arg0: i32) -> (i32, i32) {
    %c0_i32 = arith.constant 0 : i32
    %c0_i32_0 = arith.constant 0 : i32
    %c0_i32_1 = arith.constant 0 : i32
    return %c0_i32, %c0_i32_0 : i32, i32
  }
  func.func @transform_7(%arg0: i32) -> (i32, i32) {
    %c0_i32 = arith.constant 0 : i32
    %c0_i32_0 = arith.constant 0 : i32
    return %arg0, %c0_i32 : i32, i32
  }
}

module attributes {stable_mosaic.version = 11 : i64} {
  func.func @kernel(%arg0: i32, %arg1: memref<8x128xf32, #tpu.memory_space<vmem>>, %arg2: memref<128x128xf32, #tpu.memory_space<vmem>>, %arg3: memref<1x128xf32, #tpu.memory_space<vmem>>, %arg4: memref<128x128xf32, #tpu.memory_space<vmem>>, %arg5: memref<1x128xf32, #tpu.memory_space<vmem>>, %arg6: memref<128x128xf32, #tpu.memory_space<vmem>>, %arg7: memref<1x128xf32, #tpu.memory_space<vmem>>, %arg8: memref<8x128xf32, #tpu.memory_space<vmem>>) attributes {dimension_semantics = [#tpu.dimension_semantics<parallel>], iteration_bounds = array<i64: 1>, scalar_prefetch = 0 : i64, scratch_operands = 0 : i64, tpu.core_type = #tpu.core_type<tc>, window_params = [{transform_indices = @transform_0, window_bounds = array<i64: 8, 128>}, {pipeline_mode = #tpu.pipeline_mode<synchronous>, transform_indices = @transform_1, window_bounds = array<i64: 128, 128>}, {pipeline_mode = #tpu.pipeline_mode<synchronous>, transform_indices = @transform_2, window_bounds = array<i64: 1, 128>}, {pipeline_mode = #tpu.pipeline_mode<synchronous>, transform_indices = @transform_3, window_bounds = array<i64: 128, 128>}, {pipeline_mode = #tpu.pipeline_mode<synchronous>, transform_indices = @transform_4, window_bounds = array<i64: 1, 128>}, {pipeline_mode = #tpu.pipeline_mode<synchronous>, transform_indices = @transform_5, window_bounds = array<i64: 128, 128>}, {pipeline_mode = #tpu.pipeline_mode<synchronous>, transform_indices = @transform_6, window_bounds = array<i64: 1, 128>}, {transform_indices = @transform_7, window_bounds = array<i64: 8, 128>}]} {
    %c0 = arith.constant 0 : index
    %c0_0 = arith.constant 0 : index
    %0 = vector.load %arg1[%c0, %c0_0] : memref<8x128xf32, #tpu.memory_space<vmem>>, vector<8x128xf32>
    %c0_1 = arith.constant 0 : index
    %c0_2 = arith.constant 0 : index
    %1 = vector.load %arg2[%c0_1, %c0_2] : memref<128x128xf32, #tpu.memory_space<vmem>>, vector<128x128xf32>
    %cst = arith.constant dense<0.000000e+00> : vector<8x128xf32>
    %2 = tpu.matmul %0, %1, %cst {dimension_numbers = #tpu.dot_dimension_numbers<[1], [0], [0], [1], [0, 0, 1, 1], [], []>} : vector<8x128xf32>, vector<128x128xf32>, vector<8x128xf32> -> vector<8x128xf32>
    %c0_3 = arith.constant 0 : index
    %c0_4 = arith.constant 0 : index
    %3 = vector.load %arg3[%c0_3, %c0_4] : memref<1x128xf32, #tpu.memory_space<vmem>>, vector<1x128xf32>
    %4 = vector.broadcast %3 : vector<1x128xf32> to vector<8x128xf32>
    %5 = arith.addf %2, %4 : vector<8x128xf32>
    %cst_5 = arith.constant 0.000000e+00 : f32
    %6 = vector.broadcast %cst_5 : f32 to vector<8x128xf32>
    %7 = arith.maximumf %5, %6 : vector<8x128xf32>
    %c0_6 = arith.constant 0 : index
    %c0_7 = arith.constant 0 : index
    %8 = vector.load %arg4[%c0_6, %c0_7] : memref<128x128xf32, #tpu.memory_space<vmem>>, vector<128x128xf32>
    %cst_8 = arith.constant dense<0.000000e+00> : vector<8x128xf32>
    %9 = tpu.matmul %7, %8, %cst_8 {dimension_numbers = #tpu.dot_dimension_numbers<[1], [0], [0], [1], [0, 0, 1, 1], [], []>} : vector<8x128xf32>, vector<128x128xf32>, vector<8x128xf32> -> vector<8x128xf32>
    %c0_9 = arith.constant 0 : index
    %c0_10 = arith.constant 0 : index
    %10 = vector.load %arg5[%c0_9, %c0_10] : memref<1x128xf32, #tpu.memory_space<vmem>>, vector<1x128xf32>
    %11 = vector.broadcast %10 : vector<1x128xf32> to vector<8x128xf32>
    %12 = arith.addf %9, %11 : vector<8x128xf32>
    %cst_11 = arith.constant 0.000000e+00 : f32
    %13 = vector.broadcast %cst_11 : f32 to vector<8x128xf32>
    %14 = arith.maximumf %12, %13 : vector<8x128xf32>
    %c0_12 = arith.constant 0 : index
    %c0_13 = arith.constant 0 : index
    %15 = vector.load %arg6[%c0_12, %c0_13] : memref<128x128xf32, #tpu.memory_space<vmem>>, vector<128x128xf32>
    %cst_14 = arith.constant dense<0.000000e+00> : vector<8x128xf32>
    %16 = tpu.matmul %14, %15, %cst_14 {dimension_numbers = #tpu.dot_dimension_numbers<[1], [0], [0], [1], [0, 0, 1, 1], [], []>} : vector<8x128xf32>, vector<128x128xf32>, vector<8x128xf32> -> vector<8x128xf32>
    %c0_15 = arith.constant 0 : index
    %c0_16 = arith.constant 0 : index
    %17 = vector.load %arg7[%c0_15, %c0_16] : memref<1x128xf32, #tpu.memory_space<vmem>>, vector<1x128xf32>
    %18 = vector.broadcast %17 : vector<1x128xf32> to vector<8x128xf32>
    %19 = arith.addf %16, %18 : vector<8x128xf32>
    %cst_17 = arith.constant 0.000000e+00 : f32
    %20 = vector.broadcast %cst_17 : f32 to vector<8x128xf32>
    %21 = arith.maximumf %19, %20 : vector<8x128xf32>
    %c0_18 = arith.constant 0 : index
    %c0_19 = arith.constant 0 : index
    %22 = vector.load %arg8[%c0_18, %c0_19] : memref<8x128xf32, #tpu.memory_space<vmem>>, vector<8x128xf32>
    tpu.vector_store %arg8[%c0_18, %c0_19], %21 {strides = array<i32>} : memref<8x128xf32, #tpu.memory_space<vmem>>, vector<8x128xf32>,
    return
  }
  func.func @transform_0(%arg0: i32) -> (i32, i32) {
    %c0_i32 = arith.constant 0 : i32
    %c0_i32_0 = arith.constant 0 : i32
    return %arg0, %c0_i32 : i32, i32
  }
  func.func @transform_1(%arg0: i32) -> (i32, i32) {
    %c0_i32 = arith.constant 0 : i32
    %c0_i32_0 = arith.constant 0 : i32
    %c0_i32_1 = arith.constant 0 : i32
    return %c0_i32, %c0_i32_0 : i32, i32
  }
  func.func @transform_2(%arg0: i32) -> (i32, i32) {
    %c0_i32 = arith.constant 0 : i32
    %c0_i32_0 = arith.constant 0 : i32
    %c0_i32_1 = arith.constant 0 : i32
    return %c0_i32, %c0_i32_0 : i32, i32
  }
  func.func @transform_3(%arg0: i32) -> (i32, i32) {
    %c0_i32 = arith.constant 0 : i32
    %c0_i32_0 = arith.constant 0 : i32
    %c0_i32_1 = arith.constant 0 : i32
    return %c0_i32, %c0_i32_0 : i32, i32
  }
  func.func @transform_4(%arg0: i32) -> (i32, i32) {
    %c0_i32 = arith.constant 0 : i32
    %c0_i32_0 = arith.constant 0 : i32
    %c0_i32_1 = arith.constant 0 : i32
    return %c0_i32, %c0_i32_0 : i32, i32
  }
  func.func @transform_5(%arg0: i32) -> (i32, i32) {
    %c0_i32 = arith.constant 0 : i32
    %c0_i32_0 = arith.constant 0 : i32
    %c0_i32_1 = arith.constant 0 : i32
    return %c0_i32, %c0_i32_0 : i32, i32
  }
  func.func @transform_6(%arg0: i32) -> (i32, i32) {
    %c0_i32 = arith.constant 0 : i32
    %c0_i32_0 = arith.constant 0 : i32
    %c0_i32_1 = arith.constant 0 : i32
    return %c0_i32, %c0_i32_0 : i32, i32
  }
  func.func @transform_7(%arg0: i32) -> (i32, i32) {
    %c0_i32 = arith.constant 0 : i32
    %c0_i32_0 = arith.constant 0 : i32
    return %arg0, %c0_i32 : i32, i32
  }
}

</mosaic_0001>

<llo_original>
// kernel: tpu_custom_call.1
$region0: #{tpu_custom_call.1}
  #allocation0 [shape = 'u32[]', space=smem, size = 0x4, offset = 0x4, fixed_abs, tag = 'smem constant byte address 0x4 - core index']
  #allocation1 [shape = 'u32[72,128]{1,0:T(1,128)}', space=vmem, size = 0x9000, scoped, tag = 'internal scratch']
  %s0 = inlined_call_operand.hbm [shape: f32[8,128], index: 0, kind: input, shape index: {}]
  %s1 = inlined_call_operand.hbm [shape: f32[128,128], index: 1, kind: input, shape index: {}]
  %s2 = inlined_call_operand.vmem [shape: f32[1,128], index: 2, kind: input, shape index: {}]
  %s3 = inlined_call_operand.hbm [shape: f32[128,128], index: 3, kind: input, shape index: {}]
  %s4 = inlined_call_operand.vmem [shape: f32[1,128], index: 4, kind: input, shape index: {}]
  %s5 = inlined_call_operand.hbm [shape: f32[128,128], index: 5, kind: input, shape index: {}]
  %s6 = inlined_call_operand.vmem [shape: f32[1,128], index: 6, kind: input, shape index: {}]
  %s7 = inlined_call_operand.hbm [shape: f32[8,128], index: 7, kind: output, shape index: {}]
  %s8 = sld [smem:[#allocation0]]
  $region54: #{tpu_custom_call.1} parent=0
    _
  %s10 = ssub.s32 1, %s8
  %s11 = scalar_select 0, %s10, %s8
  $region1: #{tpu_custom_call.1} parent=0
    #allocation2 [shape = 'u8[4096]{0}', space=vmem, size = 0x1000, scoped, tag = 'input window, operand 0, single buffered']
    #allocation3 [shape = 's32[1]{0}', space=sflag, size = 0x4, scoped, tag = 'scoped memory for tpu_custom_call.1']
    #allocation4 [shape = 's32[1]{0}', space=sflag, size = 0x4, scoped, tag = 'scoped memory for tpu_custom_call.1']
    #allocation5 [shape = 'u8[65536]{0}', space=vmem, size = 0x10000, scoped, tag = 'input window, operand 1, single buffered']
    #allocation6 [shape = 's32[1]{0}', space=sflag, size = 0x4, scoped, tag = 'scoped memory for tpu_custom_call.1']
    #allocation7 [shape = 'u8[65536]{0}', space=vmem, size = 0x10000, scoped, tag = 'input window, operand 3, single buffered']
    #allocation8 [shape = 'u8[65536]{0}', space=vmem, size = 0x10000, scoped, tag = 'input window, operand 5, single buffered']
    #allocation9 [shape = 's32[1]{0}', space=sflag, size = 0x4, scoped, tag = 'scoped memory for tpu_custom_call.1']
    #allocation10 [shape = 'u8[4096]{0}', space=vmem, size = 0x1000, scoped, tag = 'output window, operand 0, single buffered']
    %12 = vsyncpa [#allocation3], 0
    %13 = vsyncpa [#allocation6], 0
    %14 = vsyncpa [#allocation9], 0
    %15 = vsyncpa [#allocation4], 0
    // Predicated region
    $region2: #{tpu_custom_call.1} parent=1 // pred_check
      _
    $region3: #{tpu_custom_call.1} parent=1 // pred_check_branch
      %17 = sbr.rel (0) target = $region5
    $region4: #{tpu_custom_call.1} parent=1 // pred_region
      %19 = vsyncadd [#allocation3], 0
      %s21 = sshll.u32 %s0, 4
      %s22 = int_to_ptr.hbm [resolvable:$true] %s21
      %s23 = sshll.u32 [#allocation2], 4
      %s24 = int_to_ptr.vmem [resolvable:$true] %s23
      %26 = dma.hbm_to_vmem [thread:$0]  %s22, 128, %s24, [#allocation3]
    $region5: #{tpu_custom_call.1} parent=1 // pred_fallthru
      _
    // Predicated region
    $region6: #{tpu_custom_call.1} parent=1 // pred_check
      _
    $region7: #{tpu_custom_call.1} parent=1 // pred_check_branch
      %28 = sbr.rel (0) target = $region9
    $region8: #{tpu_custom_call.1} parent=1 // pred_region
      %30 = vsyncadd [#allocation6], 0
      %s31 = sshll.u32 %s1, 4
      %s32 = int_to_ptr.hbm [resolvable:$true] %s31
      %s33 = sshll.u32 [#allocation5], 4
      %s34 = int_to_ptr.vmem [resolvable:$true] %s33
      %39 = dma.hbm_to_vmem [thread:$0]  %s32, 2048, %s34, [#allocation6], 128, 128, 8
    $region9: #{tpu_custom_call.1} parent=1 // pred_fallthru
      _
    // Predicated region
    $region10: #{tpu_custom_call.1} parent=1 // pred_check
      _
    $region11: #{tpu_custom_call.1} parent=1 // pred_check_branch
      %41 = sbr.rel (0) target = $region13
    $region12: #{tpu_custom_call.1} parent=1 // pred_region
      _
    $region13: #{tpu_custom_call.1} parent=1 // pred_fallthru
      _
    // Predicated region
    $region14: #{tpu_custom_call.1} parent=1 // pred_check
      _
    $region15: #{tpu_custom_call.1} parent=1 // pred_check_branch
      %43 = sbr.rel (0) target = $region17
    $region16: #{tpu_custom_call.1} parent=1 // pred_region
      %45 = vsyncadd [#allocation6], 0
      %s46 = sshll.u32 %s3, 4
      %s47 = int_to_ptr.hbm [resolvable:$true] %s46
      %s48 = sshll.u32 [#allocation7], 4
      %s49 = int_to_ptr.vmem [resolvable:$true] %s48
      %54 = dma.hbm_to_vmem [thread:$0]  %s47, 2048, %s49, [#allocation6], 128, 128, 8
    $region17: #{tpu_custom_call.1} parent=1 // pred_fallthru
      _
    // Predicated region
    $region18: #{tpu_custom_call.1} parent=1 // pred_check
      _
    $region19: #{tpu_custom_call.1} parent=1 // pred_check_branch
      %56 = sbr.rel (0) target = $region21
    $region20: #{tpu_custom_call.1} parent=1 // pred_region
      _
    $region21: #{tpu_custom_call.1} parent=1 // pred_fallthru
      _
    // Predicated region
    $region22: #{tpu_custom_call.1} parent=1 // pred_check
      _
    $region23: #{tpu_custom_call.1} parent=1 // pred_check_branch
      %58 = sbr.rel (0) target = $region25
    $region24: #{tpu_custom_call.1} parent=1 // pred_region
      %60 = vsyncadd [#allocation9], 0
      %s61 = sshll.u32 %s5, 4
      %s62 = int_to_ptr.hbm [resolvable:$true] %s61
      %s63 = sshll.u32 [#allocation8], 4
      %s64 = int_to_ptr.vmem [resolvable:$true] %s63
      %69 = dma.hbm_to_vmem [thread:$0]  %s62, 2048, %s64, [#allocation9], 128, 128, 8
    $region25: #{tpu_custom_call.1} parent=1 // pred_fallthru
      _
    // Predicated region
    $region26: #{tpu_custom_call.1} parent=1 // pred_check
      _
    $region27: #{tpu_custom_call.1} parent=1 // pred_check_branch
      %71 = sbr.rel (0) target = $region29
    $region28: #{tpu_custom_call.1} parent=1 // pred_region
      _
    $region29: #{tpu_custom_call.1} parent=1 // pred_fallthru
      _
    // Predicated region
    $region30: #{tpu_custom_call.1} parent=1 // pred_check
      _
    $region31: #{tpu_custom_call.1} parent=1 // pred_check_branch
      %73 = sbr.rel (0) target = $region33
    $region32: #{tpu_custom_call.1} parent=1 // pred_region
      %75 = dma.done [#allocation3], 128
    $region33: #{tpu_custom_call.1} parent=1 // pred_fallthru
      _
    // Predicated region
    $region34: #{tpu_custom_call.1} parent=1 // pred_check
      _
    $region35: #{tpu_custom_call.1} parent=1 // pred_check_branch
      %77 = sbr.rel (0) target = $region37
    $region36: #{tpu_custom_call.1} parent=1 // pred_region
      %79 = dma.done [#allocation6], 2048
    $region37: #{tpu_custom_call.1} parent=1 // pred_fallthru
      _
    // Predicated region
    $region38: #{tpu_custom_call.1} parent=1 // pred_check
      _
    $region39: #{tpu_custom_call.1} parent=1 // pred_check_branch
      %81 = sbr.rel (0) target = $region41
    $region40: #{tpu_custom_call.1} parent=1 // pred_region
      %83 = dma.done [#allocation6], 2048
    $region41: #{tpu_custom_call.1} parent=1 // pred_fallthru
      _
    // Predicated region
    $region42: #{tpu_custom_call.1} parent=1 // pred_check
      _
    $region43: #{tpu_custom_call.1} parent=1 // pred_check_branch
      %85 = sbr.rel (0) target = $region45
    $region44: #{tpu_custom_call.1} parent=1 // pred_region
      %87 = dma.done [#allocation9], 2048
    $region45: #{tpu_custom_call.1} parent=1 // pred_fallthru
      _
    %v88 = vld [vmem:[#allocation2] sm:$0xff]
    %v89 = vld [vmem:[#allocation5] sm:$0xff]
    %v90 = vld [vmem:[#allocation5 + $0x8] sm:$0xff]
    %v91 = vld [vmem:[#allocation5 + $0x10] sm:$0xff]
    %v92 = vld [vmem:[#allocation5 + $0x18] sm:$0xff]
    %v93 = vld [vmem:[#allocation5 + $0x20] sm:$0xff]
    %v94 = vld [vmem:[#allocation5 + $0x28] sm:$0xff]
    %v95 = vld [vmem:[#allocation5 + $0x30] sm:$0xff]
    %v96 = vld [vmem:[#allocation5 + $0x38] sm:$0xff]
    %v97 = vld [vmem:[#allocation5 + $0x40] sm:$0xff]
    %v98 = vld [vmem:[#allocation5 + $0x48] sm:$0xff]
    %v99 = vld [vmem:[#allocation5 + $0x50] sm:$0xff]
    %v100 = vld [vmem:[#allocation5 + $0x58] sm:$0xff]
    %v101 = vld [vmem:[#allocation5 + $0x60] sm:$0xff]
    %v102 = vld [vmem:[#allocation5 + $0x68] sm:$0xff]
    %v103 = vld [vmem:[#allocation5 + $0x70] sm:$0xff]
    %v104 = vld [vmem:[#allocation5 + $0x78] sm:$0xff]
    %v105 = vld [vmem:[%s2] sm:$0x1]
    %v107 = vperm.slane %v105, 0
    %109 = vmatpush.msra.mxu0 %v104
    %110 = vmatpush.msra.mxu0 %v103
    %111 = vmatpush.msra.mxu0 %v102
    %112 = vmatpush.msra.mxu0 %v101
    %113 = vmatpush.msra.mxu0 %v100
    %114 = vmatpush.msra.mxu0 %v99
    %115 = vmatpush.msra.mxu0 %v98
    %116 = vmatpush.msra.mxu0 %v97
    %117 = vmatpush.msra.mxu0 %v96
    %118 = vmatpush.msra.mxu0 %v95
    %119 = vmatpush.msra.mxu0 %v94
    %120 = vmatpush.msra.mxu0 %v93
    %121 = vmatpush.msra.mxu0 %v92
    %122 = vmatpush.msra.mxu0 %v91
    %123 = vmatpush.msra.mxu0 %v90
    %124 = vmatpush.msra.mxu0 %v89
    %125 = vmatmul.f32.gmra.mxu0 %v88
    %v126 = vpop.f32.mrf.mxu0
    %v127 = vadd.f32 %v107, %v126
    %128 = vdwg.mxu0
    %v129 = vmax.f32 %v127, 0.0
    %v130 = vld [vmem:[#allocation7] sm:$0xff]
    %v131 = vld [vmem:[#allocation7 + $0x8] sm:$0xff]
    %v132 = vld [vmem:[#allocation7 + $0x10] sm:$0xff]
    %v133 = vld [vmem:[#allocation7 + $0x18] sm:$0xff]
    %v134 = vld [vmem:[#allocation7 + $0x20] sm:$0xff]
    %v135 = vld [vmem:[#allocation7 + $0x28] sm:$0xff]
    %v136 = vld [vmem:[#allocation7 + $0x30] sm:$0xff]
    %v137 = vld [vmem:[#allocation7 + $0x38] sm:$0xff]
    %v138 = vld [vmem:[#allocation7 + $0x40] sm:$0xff]
    %v139 = vld [vmem:[#allocation7 + $0x48] sm:$0xff]
    %v140 = vld [vmem:[#allocation7 + $0x50] sm:$0xff]
    %v141 = vld [vmem:[#allocation7 + $0x58] sm:$0xff]
    %v142 = vld [vmem:[#allocation7 + $0x60] sm:$0xff]
    %v143 = vld [vmem:[#allocation7 + $0x68] sm:$0xff]
    %v144 = vld [vmem:[#allocation7 + $0x70] sm:$0xff]
    %v145 = vld [vmem:[#allocation7 + $0x78] sm:$0xff]
    %v146 = vld [vmem:[%s4] sm:$0x1]
    %v148 = vperm.slane %v146, 0
    %150 = vmatpush.msra.mxu0 %v145
    %151 = vmatpush.msra.mxu0 %v144
    %152 = vmatpush.msra.mxu0 %v143
    %153 = vmatpush.msra.mxu0 %v142
    %154 = vmatpush.msra.mxu0 %v141
    %155 = vmatpush.msra.mxu0 %v140
    %156 = vmatpush.msra.mxu0 %v139
    %157 = vmatpush.msra.mxu0 %v138
    %158 = vmatpush.msra.mxu0 %v137
    %159 = vmatpush.msra.mxu0 %v136
    %160 = vmatpush.msra.mxu0 %v135
    %161 = vmatpush.msra.mxu0 %v134
    %162 = vmatpush.msra.mxu0 %v133
    %163 = vmatpush.msra.mxu0 %v132
    %164 = vmatpush.msra.mxu0 %v131
    %165 = vmatpush.msra.mxu0 %v130
    %166 = vmatmul.f32.gmra.mxu0 %v129
    %v167 = vpop.f32.mrf.mxu0
    %v168 = vadd.f32 %v148, %v167
    %169 = vdwg.mxu0
    %v170 = vmax.f32 %v168, 0.0
    %v171 = vld [vmem:[#allocation8] sm:$0xff]
    %v172 = vld [vmem:[#allocation8 + $0x8] sm:$0xff]
    %v173 = vld [vmem:[#allocation8 + $0x10] sm:$0xff]
    %v174 = vld [vmem:[#allocation8 + $0x18] sm:$0xff]
    %v175 = vld [vmem:[#allocation8 + $0x20] sm:$0xff]
    %v176 = vld [vmem:[#allocation8 + $0x28] sm:$0xff]
    %v177 = vld [vmem:[#allocation8 + $0x30] sm:$0xff]
    %v178 = vld [vmem:[#allocation8 + $0x38] sm:$0xff]
    %v179 = vld [vmem:[#allocation8 + $0x40] sm:$0xff]
    %v180 = vld [vmem:[#allocation8 + $0x48] sm:$0xff]
    %v181 = vld [vmem:[#allocation8 + $0x50] sm:$0xff]
    %v182 = vld [vmem:[#allocation8 + $0x58] sm:$0xff]
    %v183 = vld [vmem:[#allocation8 + $0x60] sm:$0xff]
    %v184 = vld [vmem:[#allocation8 + $0x68] sm:$0xff]
    %v185 = vld [vmem:[#allocation8 + $0x70] sm:$0xff]
    %v186 = vld [vmem:[#allocation8 + $0x78] sm:$0xff]
    %v187 = vld [vmem:[%s6] sm:$0x1]
    %v189 = vperm.slane %v187, 0
    %191 = vmatpush.msra.mxu0 %v186
    %192 = vmatpush.msra.mxu0 %v185
    %193 = vmatpush.msra.mxu0 %v184
    %194 = vmatpush.msra.mxu0 %v183
    %195 = vmatpush.msra.mxu0 %v182
    %196 = vmatpush.msra.mxu0 %v181
    %197 = vmatpush.msra.mxu0 %v180
    %198 = vmatpush.msra.mxu0 %v179
    %199 = vmatpush.msra.mxu0 %v178
    %200 = vmatpush.msra.mxu0 %v177
    %201 = vmatpush.msra.mxu0 %v176
    %202 = vmatpush.msra.mxu0 %v175
    %203 = vmatpush.msra.mxu0 %v174
    %204 = vmatpush.msra.mxu0 %v173
    %205 = vmatpush.msra.mxu0 %v172
    %206 = vmatpush.msra.mxu0 %v171
    %207 = vmatmul.f32.gmra.mxu0 %v170
    %v208 = vpop.f32.mrf.mxu0
    %v209 = vadd.f32 %v189, %v208
    %210 = vdwg.mxu0
    %v211 = vmax.f32 %v209, 0.0
    %212 = vst [vmem:[#allocation10] sm:$0xff] %v211
    // Predicated region
    $region46: #{tpu_custom_call.1} parent=1 // pred_check
      _
    $region47: #{tpu_custom_call.1} parent=1 // pred_check_branch
      %214 = sbr.rel (0) target = $region49
    $region48: #{tpu_custom_call.1} parent=1 // pred_region
      %216 = vsyncadd [#allocation4], 0
      %s218 = sshll.u32 [#allocation10], 4
      %s219 = int_to_ptr.vmem [resolvable:$true] %s218
      %s220 = sshll.u32 %s7, 4
      %s221 = int_to_ptr.hbm [resolvable:$true] %s220
      %223 = dma.vmem_to_hbm [thread:$0]  %s219, 128, %s221, [#allocation4]
    $region49: #{tpu_custom_call.1} parent=1 // pred_fallthru
      _
    // Predicated region
    $region50: #{tpu_custom_call.1} parent=1 // pred_check
      _
    $region51: #{tpu_custom_call.1} parent=1 // pred_check_branch
      %225 = sbr.rel (0) target = $region53
    $region52: #{tpu_custom_call.1} parent=1 // pred_region
      %227 = dma.done [#allocation4], 128
    $region53: #{tpu_custom_call.1} parent=1 // pred_fallthru
      _
    %228 = vsyncpa [#allocation3], 1
    %229 = vsyncpa [#allocation6], 1
    %230 = vsyncpa [#allocation9], 1
    %231 = vsyncpa [#allocation4], 1

// kernel: tpu_custom_call.1
$region0: #{tpu_custom_call.1}
  #allocation0 [shape = 'u32[]', space=smem, size = 0x4, offset = 0x4, fixed_abs, tag = 'smem constant byte address 0x4 - core index']
  #allocation1 [shape = 'u32[72,128]{1,0:T(1,128)}', space=vmem, size = 0x9000, scoped, tag = 'internal scratch']
  %s0 = inlined_call_operand.hbm [shape: f32[8,128], index: 0, kind: input, shape index: {}]
  %s1 = inlined_call_operand.hbm [shape: f32[128,128], index: 1, kind: input, shape index: {}]
  %s2 = inlined_call_operand.vmem [shape: f32[1,128], index: 2, kind: input, shape index: {}]
  %s3 = inlined_call_operand.hbm [shape: f32[128,128], index: 3, kind: input, shape index: {}]
  %s4 = inlined_call_operand.vmem [shape: f32[1,128], index: 4, kind: input, shape index: {}]
  %s5 = inlined_call_operand.hbm [shape: f32[128,128], index: 5, kind: input, shape index: {}]
  %s6 = inlined_call_operand.vmem [shape: f32[1,128], index: 6, kind: input, shape index: {}]
  %s7 = inlined_call_operand.hbm [shape: f32[8,128], index: 7, kind: output, shape index: {}]
  %s8 = sld [smem:[#allocation0]]
  $region54: #{tpu_custom_call.1} parent=0
    _
  %s10 = ssub.s32 1, %s8
  %s11 = scalar_select 0, %s10, %s8
  $region1: #{tpu_custom_call.1} parent=0
    #allocation2 [shape = 'u8[4096]{0}', space=vmem, size = 0x1000, scoped, tag = 'input window, operand 0, single buffered']
    #allocation3 [shape = 's32[1]{0}', space=sflag, size = 0x4, scoped, tag = 'scoped memory for tpu_custom_call.1']
    #allocation4 [shape = 's32[1]{0}', space=sflag, size = 0x4, scoped, tag = 'scoped memory for tpu_custom_call.1']
    #allocation5 [shape = 'u8[65536]{0}', space=vmem, size = 0x10000, scoped, tag = 'input window, operand 1, single buffered']
    #allocation6 [shape = 's32[1]{0}', space=sflag, size = 0x4, scoped, tag = 'scoped memory for tpu_custom_call.1']
    #allocation7 [shape = 'u8[65536]{0}', space=vmem, size = 0x10000, scoped, tag = 'input window, operand 3, single buffered']
    #allocation8 [shape = 'u8[65536]{0}', space=vmem, size = 0x10000, scoped, tag = 'input window, operand 5, single buffered']
    #allocation9 [shape = 's32[1]{0}', space=sflag, size = 0x4, scoped, tag = 'scoped memory for tpu_custom_call.1']
    #allocation10 [shape = 'u8[4096]{0}', space=vmem, size = 0x1000, scoped, tag = 'output window, operand 0, single buffered']
    %12 = vsyncpa [#allocation3], 0
    %13 = vsyncpa [#allocation6], 0
    %14 = vsyncpa [#allocation9], 0
    %15 = vsyncpa [#allocation4], 0
    // Predicated region
    $region2: #{tpu_custom_call.1} parent=1 // pred_check
      _
    $region3: #{tpu_custom_call.1} parent=1 // pred_check_branch
      %17 = sbr.rel (0) target = $region5
    $region4: #{tpu_custom_call.1} parent=1 // pred_region
      %19 = vsyncadd [#allocation3], 0
      %s21 = sshll.u32 %s0, 4
      %s22 = int_to_ptr.hbm [resolvable:$true] %s21
      %s23 = sshll.u32 [#allocation2], 4
      %s24 = int_to_ptr.vmem [resolvable:$true] %s23
      %26 = dma.hbm_to_vmem [thread:$0]  %s22, 128, %s24, [#allocation3]
    $region5: #{tpu_custom_call.1} parent=1 // pred_fallthru
      _
    // Predicated region
    $region6: #{tpu_custom_call.1} parent=1 // pred_check
      _
    $region7: #{tpu_custom_call.1} parent=1 // pred_check_branch
      %28 = sbr.rel (0) target = $region9
    $region8: #{tpu_custom_call.1} parent=1 // pred_region
      %30 = vsyncadd [#allocation6], 0
      %s31 = sshll.u32 %s1, 4
      %s32 = int_to_ptr.hbm [resolvable:$true] %s31
      %s33 = sshll.u32 [#allocation5], 4
      %s34 = int_to_ptr.vmem [resolvable:$true] %s33
      %39 = dma.hbm_to_vmem [thread:$0]  %s32, 2048, %s34, [#allocation6], 128, 128, 8
    $region9: #{tpu_custom_call.1} parent=1 // pred_fallthru
      _
    // Predicated region
    $region10: #{tpu_custom_call.1} parent=1 // pred_check
      _
    $region11: #{tpu_custom_call.1} parent=1 // pred_check_branch
      %41 = sbr.rel (0) target = $region13
    $region12: #{tpu_custom_call.1} parent=1 // pred_region
      _
    $region13: #{tpu_custom_call.1} parent=1 // pred_fallthru
      _
    // Predicated region
    $region14: #{tpu_custom_call.1} parent=1 // pred_check
      _
    $region15: #{tpu_custom_call.1} parent=1 // pred_check_branch
      %43 = sbr.rel (0) target = $region17
    $region16: #{tpu_custom_call.1} parent=1 // pred_region
      %45 = vsyncadd [#allocation6], 0
      %s46 = sshll.u32 %s3, 4
      %s47 = int_to_ptr.hbm [resolvable:$true] %s46
      %s48 = sshll.u32 [#allocation7], 4
      %s49 = int_to_ptr.vmem [resolvable:$true] %s48
      %54 = dma.hbm_to_vmem [thread:$0]  %s47, 2048, %s49, [#allocation6], 128, 128, 8
    $region17: #{tpu_custom_call.1} parent=1 // pred_fallthru
      _
    // Predicated region
    $region18: #{tpu_custom_call.1} parent=1 // pred_check
      _
    $region19: #{tpu_custom_call.1} parent=1 // pred_check_branch
      %56 = sbr.rel (0) target = $region21
    $region20: #{tpu_custom_call.1} parent=1 // pred_region
      _
    $region21: #{tpu_custom_call.1} parent=1 // pred_fallthru
      _
    // Predicated region
    $region22: #{tpu_custom_call.1} parent=1 // pred_check
      _
    $region23: #{tpu_custom_call.1} parent=1 // pred_check_branch
      %58 = sbr.rel (0) target = $region25
    $region24: #{tpu_custom_call.1} parent=1 // pred_region
      %60 = vsyncadd [#allocation9], 0
      %s61 = sshll.u32 %s5, 4
      %s62 = int_to_ptr.hbm [resolvable:$true] %s61
      %s63 = sshll.u32 [#allocation8], 4
      %s64 = int_to_ptr.vmem [resolvable:$true] %s63
      %69 = dma.hbm_to_vmem [thread:$0]  %s62, 2048, %s64, [#allocation9], 128, 128, 8
    $region25: #{tpu_custom_call.1} parent=1 // pred_fallthru
      _
    // Predicated region
    $region26: #{tpu_custom_call.1} parent=1 // pred_check
      _
    $region27: #{tpu_custom_call.1} parent=1 // pred_check_branch
      %71 = sbr.rel (0) target = $region29
    $region28: #{tpu_custom_call.1} parent=1 // pred_region
      _
    $region29: #{tpu_custom_call.1} parent=1 // pred_fallthru
      _
    // Predicated region
    $region30: #{tpu_custom_call.1} parent=1 // pred_check
      _
    $region31: #{tpu_custom_call.1} parent=1 // pred_check_branch
      %73 = sbr.rel (0) target = $region33
    $region32: #{tpu_custom_call.1} parent=1 // pred_region
      %75 = dma.done [#allocation3], 128
    $region33: #{tpu_custom_call.1} parent=1 // pred_fallthru
      _
    // Predicated region
    $region34: #{tpu_custom_call.1} parent=1 // pred_check
      _
    $region35: #{tpu_custom_call.1} parent=1 // pred_check_branch
      %77 = sbr.rel (0) target = $region37
    $region36: #{tpu_custom_call.1} parent=1 // pred_region
      %79 = dma.done [#allocation6], 2048
    $region37: #{tpu_custom_call.1} parent=1 // pred_fallthru
      _
    // Predicated region
    $region38: #{tpu_custom_call.1} parent=1 // pred_check
      _
    $region39: #{tpu_custom_call.1} parent=1 // pred_check_branch
      %81 = sbr.rel (0) target = $region41
    $region40: #{tpu_custom_call.1} parent=1 // pred_region
      %83 = dma.done [#allocation6], 2048
    $region41: #{tpu_custom_call.1} parent=1 // pred_fallthru
      _
    // Predicated region
    $region42: #{tpu_custom_call.1} parent=1 // pred_check
      _
    $region43: #{tpu_custom_call.1} parent=1 // pred_check_branch
      %85 = sbr.rel (0) target = $region45
    $region44: #{tpu_custom_call.1} parent=1 // pred_region
      %87 = dma.done [#allocation9], 2048
    $region45: #{tpu_custom_call.1} parent=1 // pred_fallthru
      _
    %v88 = vld [vmem:[#allocation2] sm:$0xff]
    %v89 = vld [vmem:[#allocation5] sm:$0xff]
    %v90 = vld [vmem:[#allocation5 + $0x8] sm:$0xff]
    %v91 = vld [vmem:[#allocation5 + $0x10] sm:$0xff]
    %v92 = vld [vmem:[#allocation5 + $0x18] sm:$0xff]
    %v93 = vld [vmem:[#allocation5 + $0x20] sm:$0xff]
    %v94 = vld [vmem:[#allocation5 + $0x28] sm:$0xff]
    %v95 = vld [vmem:[#allocation5 + $0x30] sm:$0xff]
    %v96 = vld [vmem:[#allocation5 + $0x38] sm:$0xff]
    %v97 = vld [vmem:[#allocation5 + $0x40] sm:$0xff]
    %v98 = vld [vmem:[#allocation5 + $0x48] sm:$0xff]
    %v99 = vld [vmem:[#allocation5 + $0x50] sm:$0xff]
    %v100 = vld [vmem:[#allocation5 + $0x58] sm:$0xff]
    %v101 = vld [vmem:[#allocation5 + $0x60] sm:$0xff]
    %v102 = vld [vmem:[#allocation5 + $0x68] sm:$0xff]
    %v103 = vld [vmem:[#allocation5 + $0x70] sm:$0xff]
    %v104 = vld [vmem:[#allocation5 + $0x78] sm:$0xff]
    %v105 = vld [vmem:[%s2] sm:$0x1]
    %v107 = vperm.slane %v105, 0
    %109 = vmatpush.msra.mxu0 %v104
    %110 = vmatpush.msra.mxu0 %v103
    %111 = vmatpush.msra.mxu0 %v102
    %112 = vmatpush.msra.mxu0 %v101
    %113 = vmatpush.msra.mxu0 %v100
    %114 = vmatpush.msra.mxu0 %v99
    %115 = vmatpush.msra.mxu0 %v98
    %116 = vmatpush.msra.mxu0 %v97
    %117 = vmatpush.msra.mxu0 %v96
    %118 = vmatpush.msra.mxu0 %v95
    %119 = vmatpush.msra.mxu0 %v94
    %120 = vmatpush.msra.mxu0 %v93
    %121 = vmatpush.msra.mxu0 %v92
    %122 = vmatpush.msra.mxu0 %v91
    %123 = vmatpush.msra.mxu0 %v90
    %124 = vmatpush.msra.mxu0 %v89
    %125 = vmatmul.f32.gmra.mxu0 %v88
    %v126 = vpop.f32.mrf.mxu0
    %v127 = vadd.f32 %v107, %v126
    %128 = vdwg.mxu0
    %v129 = vmax.f32 %v127, 0.0
    %v130 = vld [vmem:[#allocation7] sm:$0xff]
    %v131 = vld [vmem:[#allocation7 + $0x8] sm:$0xff]
    %v132 = vld [vmem:[#allocation7 + $0x10] sm:$0xff]
    %v133 = vld [vmem:[#allocation7 + $0x18] sm:$0xff]
    %v134 = vld [vmem:[#allocation7 + $0x20] sm:$0xff]
    %v135 = vld [vmem:[#allocation7 + $0x28] sm:$0xff]
    %v136 = vld [vmem:[#allocation7 + $0x30] sm:$0xff]
    %v137 = vld [vmem:[#allocation7 + $0x38] sm:$0xff]
    %v138 = vld [vmem:[#allocation7 + $0x40] sm:$0xff]
    %v139 = vld [vmem:[#allocation7 + $0x48] sm:$0xff]
    %v140 = vld [vmem:[#allocation7 + $0x50] sm:$0xff]
    %v141 = vld [vmem:[#allocation7 + $0x58] sm:$0xff]
    %v142 = vld [vmem:[#allocation7 + $0x60] sm:$0xff]
    %v143 = vld [vmem:[#allocation7 + $0x68] sm:$0xff]
    %v144 = vld [vmem:[#allocation7 + $0x70] sm:$0xff]
    %v145 = vld [vmem:[#allocation7 + $0x78] sm:$0xff]
    %v146 = vld [vmem:[%s4] sm:$0x1]
    %v148 = vperm.slane %v146, 0
    %150 = vmatpush.msra.mxu0 %v145
    %151 = vmatpush.msra.mxu0 %v144
    %152 = vmatpush.msra.mxu0 %v143
    %153 = vmatpush.msra.mxu0 %v142
    %154 = vmatpush.msra.mxu0 %v141
    %155 = vmatpush.msra.mxu0 %v140
    %156 = vmatpush.msra.mxu0 %v139
    %157 = vmatpush.msra.mxu0 %v138
    %158 = vmatpush.msra.mxu0 %v137
    %159 = vmatpush.msra.mxu0 %v136
    %160 = vmatpush.msra.mxu0 %v135
    %161 = vmatpush.msra.mxu0 %v134
    %162 = vmatpush.msra.mxu0 %v133
    %163 = vmatpush.msra.mxu0 %v132
    %164 = vmatpush.msra.mxu0 %v131
    %165 = vmatpush.msra.mxu0 %v130
    %166 = vmatmul.f32.gmra.mxu0 %v129
    %v167 = vpop.f32.mrf.mxu0
    %v168 = vadd.f32 %v148, %v167
    %169 = vdwg.mxu0
    %v170 = vmax.f32 %v168, 0.0
    %v171 = vld [vmem:[#allocation8] sm:$0xff]
    %v172 = vld [vmem:[#allocation8 + $0x8] sm:$0xff]
    %v173 = vld [vmem:[#allocation8 + $0x10] sm:$0xff]
    %v174 = vld [vmem:[#allocation8 + $0x18] sm:$0xff]
    %v175 = vld [vmem:[#allocation8 + $0x20] sm:$0xff]
    %v176 = vld [vmem:[#allocation8 + $0x28] sm:$0xff]
    %v177 = vld [vmem:[#allocation8 + $0x30] sm:$0xff]
    %v178 = vld [vmem:[#allocation8 + $0x38] sm:$0xff]
    %v179 = vld [vmem:[#allocation8 + $0x40] sm:$0xff]
    %v180 = vld [vmem:[#allocation8 + $0x48] sm:$0xff]
    %v181 = vld [vmem:[#allocation8 + $0x50] sm:$0xff]
    %v182 = vld [vmem:[#allocation8 + $0x58] sm:$0xff]
    %v183 = vld [vmem:[#allocation8 + $0x60] sm:$0xff]
    %v184 = vld [vmem:[#allocation8 + $0x68] sm:$0xff]
    %v185 = vld [vmem:[#allocation8 + $0x70] sm:$0xff]
    %v186 = vld [vmem:[#allocation8 + $0x78] sm:$0xff]
    %v187 = vld [vmem:[%s6] sm:$0x1]
    %v189 = vperm.slane %v187, 0
    %191 = vmatpush.msra.mxu0 %v186
    %192 = vmatpush.msra.mxu0 %v185
    %193 = vmatpush.msra.mxu0 %v184
    %194 = vmatpush.msra.mxu0 %v183
    %195 = vmatpush.msra.mxu0 %v182
    %196 = vmatpush.msra.mxu0 %v181
    %197 = vmatpush.msra.mxu0 %v180
    %198 = vmatpush.msra.mxu0 %v179
    %199 = vmatpush.msra.mxu0 %v178
    %200 = vmatpush.msra.mxu0 %v177
    %201 = vmatpush.msra.mxu0 %v176
    %202 = vmatpush.msra.mxu0 %v175
    %203 = vmatpush.msra.mxu0 %v174
    %204 = vmatpush.msra.mxu0 %v173
    %205 = vmatpush.msra.mxu0 %v172
    %206 = vmatpush.msra.mxu0 %v171
    %207 = vmatmul.f32.gmra.mxu0 %v170
    %v208 = vpop.f32.mrf.mxu0
    %v209 = vadd.f32 %v189, %v208
    %210 = vdwg.mxu0
    %v211 = vmax.f32 %v209, 0.0
    %212 = vst [vmem:[#allocation10] sm:$0xff] %v211
    // Predicated region
    $region46: #{tpu_custom_call.1} parent=1 // pred_check
      _
    $region47: #{tpu_custom_call.1} parent=1 // pred_check_branch
      %214 = sbr.rel (0) target = $region49
    $region48: #{tpu_custom_call.1} parent=1 // pred_region
      %216 = vsyncadd [#allocation4], 0
      %s218 = sshll.u32 [#allocation10], 4
      %s219 = int_to_ptr.vmem [resolvable:$true] %s218
      %s220 = sshll.u32 %s7, 4
      %s221 = int_to_ptr.hbm [resolvable:$true] %s220
      %223 = dma.vmem_to_hbm [thread:$0]  %s219, 128, %s221, [#allocation4]
    $region49: #{tpu_custom_call.1} parent=1 // pred_fallthru
      _
    // Predicated region
    $region50: #{tpu_custom_call.1} parent=1 // pred_check
      _
    $region51: #{tpu_custom_call.1} parent=1 // pred_check_branch
      %225 = sbr.rel (0) target = $region53
    $region52: #{tpu_custom_call.1} parent=1 // pred_region
      %227 = dma.done [#allocation4], 128
    $region53: #{tpu_custom_call.1} parent=1 // pred_fallthru
      _
    %228 = vsyncpa [#allocation3], 1
    %229 = vsyncpa [#allocation6], 1
    %230 = vsyncpa [#allocation9], 1
    %231 = vsyncpa [#allocation4], 1

</llo_original>
